<compile_context>
chip_gen: v7x
topology: tpu7x:2x2x1
jax: 0.10.0
libtpu: 0.0.40
codegen_flags: <defaults>
</compile_context>

<pallas_src>
import functools

import jax
import jax.numpy as jnp
from jax import lax
from jax.experimental import pallas as pl
from jax.experimental.pallas import tpu as pltpu


def _poly1_ce_kernel(logits_ref, labels_ref, out_ref, *, epsilon):
    # logits_ref: (1, C, S, 128); labels_ref / out_ref: (1, 1, S, 128)
    x = logits_ref[...].astype(jnp.float32)
    lab = labels_ref[...].astype(jnp.int32)

    # Channel reductions are over a leading (non-vreg) axis -> pure VPU max/add
    # over full (S, 128) vregs; no sublane padding waste, no XLU reductions.
    m = jnp.max(x, axis=1, keepdims=True)                 # (1, 1, S, 128)
    e = jnp.exp(x - m)                                     # single exp over C
    s = jnp.sum(e, axis=1, keepdims=True)                  # (1, 1, S, 128)

    # Gather logits[label] via an iota compare (no one-hot materialization).
    c_iota = lax.broadcasted_iota(jnp.int32, x.shape, 1)   # (1, C, S, 128)
    x_lab = jnp.sum(jnp.where(c_iota == lab, x, 0.0), axis=1, keepdims=True)

    ce = jnp.log(s) - (x_lab - m)      # logsumexp(x) - x[label]   (stable CE)
    pt = jnp.exp(-ce)                  # == softmax(x)[label]; uses the EUP slot
    out_ref[...] = (ce + epsilon * (1.0 - pt)).astype(out_ref.dtype)


def poly1_cross_entropy_loss(logits, target, *, epsilon=1.0, softmax=True,
                             reduction='none', target_block_bytes=2 << 20):
    """logits: [N, C, *spatial] float; target: [N, 1, *spatial] / [N, *spatial]
    integer class ids, or one-hot [N, C, *spatial]."""
    assert softmax, "only softmax=True (logit input) path is implemented"
    # TODO(synk): ce_weight (per-class CE weights) and ignore_index not supported.

    N, C = logits.shape[0], logits.shape[1]
    spatial = logits.shape[2:]
    hw = 1
    for d in spatial:
        hw *= d

    # Normalize target to a class-id map of shape [N, 1, H*W].
    if target.ndim == logits.ndim - 1:
        target = target[:, None]
    if target.shape[1] == C and C > 1:
        labels = jnp.argmax(target, axis=1, keepdims=True)   # one-hot -> ids
    else:
        labels = target

    # Keep caller dtype for logits: bf16 flows through the DMA un-upcast; the
    # kernel widens to f32 in-register.
    x = logits.reshape(N, C, hw)
    elem = x.dtype.itemsize

    # Bandwidth-aware tile: ~target_block_bytes of logits per grid step so the
    # fixed per-step pipeline overhead is hidden; clamp so double-buffered VMEM
    # stays far below the scoped limit on every chip generation.
    s_rows = target_block_bytes // (elem * C * 128)
    s_rows = max(8, min((int(s_rows) // 8) * 8, 4096))        # multiple of 8 sublanes
    s_full = pl.cdiv(pl.cdiv(hw, 128), 8) * 8                 # spatial extent, rounded
    s_rows = min(s_rows, s_full)
    tile = s_rows * 128
    phw = pl.cdiv(hw, tile) * tile

    # Shrink the label HBM stream when the layout allows a packed int8 tile.
    lab_dtype = jnp.int8 if (C <= 127 and s_rows % 32 == 0) else jnp.int32
    labels = labels.astype(lab_dtype).reshape(N, 1, hw)

    if phw != hw:
        x = jnp.pad(x, ((0, 0), (0, 0), (0, phw - hw)))
        labels = jnp.pad(labels, ((0, 0), (0, 0), (0, phw - hw)))

    # (sublane, lane) layout: spatial folded into (phw//128, 128).
    sl = phw // 128
    x = x.reshape(N, C, sl, 128)
    labels = labels.reshape(N, 1, sl, 128)

    kernel = functools.partial(_poly1_ce_kernel, epsilon=float(epsilon))
    n_tiles = phw // tile

    cost = pl.CostEstimate(
        flops=8 * N * phw * C,
        transcendentals=N * phw * (C + 2),
        bytes_accessed=N * phw * (C * elem + labels.dtype.itemsize + 4),
    )

    per_pix = pl.pallas_call(
        kernel,
        out_shape=jax.ShapeDtypeStruct((N, 1, sl, 128), jnp.float32),
        grid_spec=pltpu.PrefetchScalarGridSpec(
            num_scalar_prefetch=0,
            grid=(N, n_tiles),
            in_specs=[
                pl.BlockSpec((1, C, s_rows, 128), lambda n, s: (n, 0, s, 0)),
                pl.BlockSpec((1, 1, s_rows, 128), lambda n, s: (n, 0, s, 0)),
            ],
            out_specs=pl.BlockSpec((1, 1, s_rows, 128), lambda n, s: (n, 0, s, 0)),
        ),
        compiler_params=pltpu.CompilerParams(
            dimension_semantics=("parallel", "parallel")),
        cost_estimate=cost,
    )(x, labels)

    per_pix = per_pix.reshape(N, phw)[:, :hw].reshape((N,) + spatial)

    # TODO(synk): fuse 'mean'/'sum' into the kernel (accumulator scratch, spatial
    # axis 'arbitrary', pl.when init/finalize, masking padded tail lanes) to avoid
    # writing + re-reading the full per-pixel map on the training path.
    if reduction == 'mean':
        return jnp.mean(per_pix)
    elif reduction == 'sum':
        return jnp.sum(per_pix)
    elif reduction == 'none':
        return per_pix
    raise ValueError(f"Unsupported reduction: {reduction}")


def _reference_poly1_ce(logits, labels, *, epsilon=1.0):
    """Pure-JAX reference mirroring the PyTorch forward (reduction='none')."""
    x = logits.astype(jnp.float32)
    lab = labels[:, 0]                                         # [N, H, W]
    logp = jax.nn.log_softmax(x, axis=1)
    ce = -jnp.take_along_axis(logp, lab[:, None], axis=1)[:, 0]
    p = jax.nn.softmax(x, axis=1)
    pt = jnp.take_along_axis(p, lab[:, None], axis=1)[:, 0]
    return ce + epsilon * (1.0 - pt)


if __name__ == "__main__":
    key = jax.random.PRNGKey(0)
    k_logits, k_labels = jax.random.split(key)

    N, C, H, W = 2, 4, 16, 16
    logits = jax.random.normal(k_logits, (N, C, H, W), dtype=jnp.float32)
    labels = jax.random.randint(k_labels, (N, 1, H, W), 0, C, dtype=jnp.int32)

    out = poly1_cross_entropy_loss(logits, labels, epsilon=1.0,
                                   softmax=True, reduction='none')
    out = jax.block_until_ready(out)

    ref = _reference_poly1_ce(logits, labels, epsilon=1.0)
    assert out.shape == (N, H, W)
    assert jnp.allclose(out, ref, atol=1e-5, rtol=1e-5)

    print("KERNEL_OK")
</pallas_src>

<mosaic_0001>
module attributes {stable_mosaic.version = 11 : i64} {
  func.func @_poly1_ce_kernel(%arg0: i32, %arg1: i32, %arg2: memref<1x4x8x128xf32, #tpu.memory_space<vmem>>, %arg3: memref<1x1x8x128xi32, #tpu.memory_space<vmem>>, %arg4: memref<1x1x8x128xf32, #tpu.memory_space<vmem>>) attributes {dimension_semantics = [#tpu.dimension_semantics<parallel>, #tpu.dimension_semantics<parallel>], iteration_bounds = array<i64: 2, 1>, scalar_prefetch = 0 : i64, scratch_operands = 0 : i64, tpu.core_type = #tpu.core_type<tc>, window_params = [{transform_indices = @transform_0, window_bounds = array<i64: 1, 4, 8, 128>}, {transform_indices = @transform_1, window_bounds = array<i64: 1, 1, 8, 128>}, {transform_indices = @transform_2, window_bounds = array<i64: 1, 1, 8, 128>}]} {
    %c0 = arith.constant 0 : index
    %c0_0 = arith.constant 0 : index
    %c0_1 = arith.constant 0 : index
    %c0_2 = arith.constant 0 : index
    %0 = vector.load %arg2[%c0, %c0_0, %c0_1, %c0_2] : memref<1x4x8x128xf32, #tpu.memory_space<vmem>>, vector<1x4x8x128xf32>
    %c0_3 = arith.constant 0 : index
    %c0_4 = arith.constant 0 : index
    %c0_5 = arith.constant 0 : index
    %c0_6 = arith.constant 0 : index
    %1 = vector.load %arg3[%c0_3, %c0_4, %c0_5, %c0_6] : memref<1x1x8x128xi32, #tpu.memory_space<vmem>>, vector<1x1x8x128xi32>
    %cst = arith.constant dense<0xFF800000> : vector<1x8x128xf32>
    %2 = vector.multi_reduction <maximumf>, %0, %cst [1] : vector<1x4x8x128xf32> to vector<1x8x128xf32>
    %3 = vector.shape_cast %2 : vector<1x8x128xf32> to vector<1x1x8x128xf32>
    %4 = vector.broadcast %3 : vector<1x1x8x128xf32> to vector<1x4x8x128xf32>
    %5 = arith.subf %0, %4 : vector<1x4x8x128xf32>
    %6 = math.exp %5 : vector<1x4x8x128xf32>
    %cst_7 = arith.constant dense<0.000000e+00> : vector<1x8x128xf32>
    %7 = vector.multi_reduction <add>, %6, %cst_7 [1] : vector<1x4x8x128xf32> to vector<1x8x128xf32>
    %8 = vector.shape_cast %7 : vector<1x8x128xf32> to vector<1x1x8x128xf32>
    %9 = tpu.iota {dimensions = array<i32: 1>} : vector<1x4x8x128xi32>
    %10 = vector.broadcast %1 : vector<1x1x8x128xi32> to vector<1x4x8x128xi32>
    %11 = arith.cmpi eq, %9, %10 : vector<1x4x8x128xi32>
    %cst_8 = arith.constant 0.000000e+00 : f32
    %12 = vector.broadcast %cst_8 : f32 to vector<1x4x8x128xf32>
    %13 = arith.select %11, %0, %12 : vector<1x4x8x128xi1>, vector<1x4x8x128xf32>
    %cst_9 = arith.constant dense<0.000000e+00> : vector<1x8x128xf32>
    %14 = vector.multi_reduction <add>, %13, %cst_9 [1] : vector<1x4x8x128xf32> to vector<1x8x128xf32>
    %15 = vector.shape_cast %14 : vector<1x8x128xf32> to vector<1x1x8x128xf32>
    %16 = math.log %8 : vector<1x1x8x128xf32>
    %17 = arith.subf %15, %3 : vector<1x1x8x128xf32>
    %18 = arith.subf %16, %17 : vector<1x1x8x128xf32>
    %cst_10 = arith.constant 0.000000e+00 : f32
    %19 = vector.broadcast %cst_10 : f32 to vector<1x1x8x128xf32>
    %20 = arith.subf %19, %18 : vector<1x1x8x128xf32>
    %21 = math.exp %20 : vector<1x1x8x128xf32>
    %cst_11 = arith.constant 1.000000e+00 : f32
    %22 = vector.broadcast %cst_11 : f32 to vector<1x1x8x128xf32>
    %23 = arith.subf %22, %21 : vector<1x1x8x128xf32>
    %cst_12 = arith.constant 1.000000e+00 : f32
    %24 = vector.broadcast %cst_12 : f32 to vector<1x1x8x128xf32>
    %25 = arith.mulf %24, %23 : vector<1x1x8x128xf32>
    %26 = arith.addf %18, %25 : vector<1x1x8x128xf32>
    %c0_13 = arith.constant 0 : index
    %c0_14 = arith.constant 0 : index
    %c0_15 = arith.constant 0 : index
    %c0_16 = arith.constant 0 : index
    %27 = vector.load %arg4[%c0_13, %c0_14, %c0_15, %c0_16] : memref<1x1x8x128xf32, #tpu.memory_space<vmem>>, vector<1x1x8x128xf32>
    tpu.vector_store %arg4[%c0_13, %c0_14, %c0_15, %c0_16], %26 {strides = array<i32>} : memref<1x1x8x128xf32, #tpu.memory_space<vmem>>, vector<1x1x8x128xf32>,
    return
  }
  func.func @transform_0(%arg0: i32, %arg1: i32) -> (i32, i32, i32, i32) {
    %c0_i32 = arith.constant 0 : i32
    %c0_i32_0 = arith.constant 0 : i32
    %c0_i32_1 = arith.constant 0 : i32
    return %arg0, %c0_i32, %arg1, %c0_i32_0 : i32, i32, i32, i32
  }
  func.func @transform_1(%arg0: i32, %arg1: i32) -> (i32, i32, i32, i32) {
    %c0_i32 = arith.constant 0 : i32
    %c0_i32_0 = arith.constant 0 : i32
    %c0_i32_1 = arith.constant 0 : i32
    return %arg0, %c0_i32, %arg1, %c0_i32_0 : i32, i32, i32, i32
  }
  func.func @transform_2(%arg0: i32, %arg1: i32) -> (i32, i32, i32, i32) {
    %c0_i32 = arith.constant 0 : i32
    %c0_i32_0 = arith.constant 0 : i32
    %c0_i32_1 = arith.constant 0 : i32
    return %arg0, %c0_i32, %arg1, %c0_i32_0 : i32, i32, i32, i32
  }
}

</mosaic_0001>

<llo_original>
// kernel: tpu_custom_call.1
$region0: #{tpu_custom_call.1}
  #allocation0 [shape = 'u32[]', space=smem, size = 0x4, offset = 0x4, fixed_abs, tag = 'smem constant byte address 0x4 - core index']
  #allocation1 [shape = 'u32[144,128]{1,0:T(1,128)}', space=vmem, size = 0x12000, scoped, tag = 'internal scratch']
  %s0 = inlined_call_operand.hbm [shape: f32[2,4,8,128], index: 0, kind: input, shape index: {}]
  %s1 = inlined_call_operand.hbm [shape: s32[2,1,8,128], index: 1, kind: input, shape index: {}]
  %s2 = inlined_call_operand.hbm [shape: f32[2,1,8,128], index: 2, kind: output, shape index: {}]
  %s3 = sld [smem:[#allocation0]]
  $region49: #{tpu_custom_call.1} parent=0
    _
  %s5 = ssub.s32 1, %s3
  %s6 = scalar_select 0, %s5, %s3
  $region1: #{tpu_custom_call.1} parent=0
    #allocation2 [shape = 'u8[32768]{0}', space=vmem, size = 0x8000, scoped, tag = 'input window, operand 0']
    #allocation3 [shape = 's32[2]{0}', space=sflag, size = 0x8, scoped, tag = 'scoped memory for tpu_custom_call.1']
    #allocation4 [shape = 's32[2]{0}', space=sflag, size = 0x8, scoped, tag = 'scoped memory for tpu_custom_call.1']
    #allocation5 [shape = 'u8[8192]{0}', space=vmem, size = 0x2000, scoped, tag = 'input window, operand 1']
    #allocation6 [shape = 's32[2]{0}', space=sflag, size = 0x8, scoped, tag = 'scoped memory for tpu_custom_call.1']
    #allocation7 [shape = 'u8[8192]{0}', space=vmem, size = 0x2000, scoped, tag = 'output window, operand 0']
    %7 = vsyncpa [#allocation3], 0
    %s8 = scalar_lea.sflag [#allocation3], 1
    %9 = vsyncpa %s8, 0
    %10 = vsyncpa [#allocation6], 0
    %s11 = scalar_lea.sflag [#allocation6], 1
    %12 = vsyncpa %s11, 0
    %13 = vsyncpa [#allocation4], 0
    %s14 = scalar_lea.sflag [#allocation4], 1
    %15 = vsyncpa %s14, 0
    loop: start=0, step=1, limit=4
    $region2: #{tpu_custom_call.1} parent=1 // loop_pre_header
      _
    $region3: #{tpu_custom_call.1} parent=1 // loop_header
      %s17 = sphi 0, %s21
      %p18 = scmp.ge.s32.totalorder %s17, 4
      %s24 = sphi 0, %s36
      %s25 = sphi 0, %s32
      %s26 = sphi 0, %s24
      %s27 = sphi 0, %s25
      %s28 = sphi 0, %s26
      %s29 = sphi 0, %s27
      %s41 = sphi 0, %s43
      %s44 = sphi 0, %s41
      %s45 = sphi 0, %s44
      %s61 = sphi 0, %s45
      %s69 = sphi 0, %s71
      %s72 = sphi 0, %s69
      %s73 = sphi 0, %s72
      %s89 = sphi 0, %s73
      %s97 = sphi 0, %s99
      %s100 = sphi 0, %s97
      %s101 = sphi 0, %s100
      %s117 = sphi 0, %s101
    $region4: #{tpu_custom_call.1} parent=1 // loop_header_branch
      %20 = sbr.rel (%p18) target = $region8
    $region5: #{tpu_custom_call.1} parent=1 // loop_body
      %s22 = ssub.s32 %s17, 1
      %s23 = ssub.s32 %s17, 2
      %s30 = sadd.s32 1, %s25
      %p31 = scmp.ge.s32.totalorder %s30, 1
      %s32 = scalar_select %p31, 0, %s30
      %s33 = sadd.s32 1, %s24
      %s34 = scalar_select %p31, %s33, %s24
      %p35 = scmp.ge.s32.totalorder %s34, 2
      %s36 = scalar_select %p35, 0, %s34
      %s37 = ssub.s32 %s24, %s36
      %s38 = ssub.s32 %s25, %s32
      %s39 = sor.u32 %s37, %s38
      %p40 = scmp.eq.s32.totalorder %s39, 0
      %s42 = sadd.s32 %s41, 1
      %s43 = scalar_select %p40, %s41, %s42
      %p46 = pneg %p40
      %p47 = scmp.eq.s32.totalorder %s17, 1
      %p48 = por %p46, %p47
      %p49 = scmp.ne.s32.totalorder %s41, %s44
      %p50 = scmp.eq.s32.totalorder %s17, 0
      %p51 = por %p49, %p50
      %p52 = scmp.ne.s32.totalorder %s41, %s44
      %p53 = scmp.eq.s32.totalorder %s22, 1
      %p54 = por %p52, %p53
      %p55 = scmp.ne.s32.totalorder %s44, %s45
      %p56 = scmp.eq.s32.totalorder %s22, 0
      %p57 = por %p55, %p56
      %p58 = scmp.ne.s32.totalorder %s44, %s45
      %p59 = scmp.eq.s32.totalorder %s23, 1
      %p60 = por %p58, %p59
      %p62 = scmp.ne.s32.totalorder %s45, %s61
      %p63 = scmp.eq.s32.totalorder %s23, 0
      %p64 = por %p62, %p63
      %s65 = ssub.s32 %s24, %s36
      %s66 = ssub.s32 %s25, %s32
      %s67 = sor.u32 %s65, %s66
      %p68 = scmp.eq.s32.totalorder %s67, 0
      %s70 = sadd.s32 %s69, 1
      %s71 = scalar_select %p68, %s69, %s70
      %p74 = pneg %p68
      %p75 = scmp.eq.s32.totalorder %s17, 1
      %p76 = por %p74, %p75
      %p77 = scmp.ne.s32.totalorder %s69, %s72
      %p78 = scmp.eq.s32.totalorder %s17, 0
      %p79 = por %p77, %p78
      %p80 = scmp.ne.s32.totalorder %s69, %s72
      %p81 = scmp.eq.s32.totalorder %s22, 1
      %p82 = por %p80, %p81
      %p83 = scmp.ne.s32.totalorder %s72, %s73
      %p84 = scmp.eq.s32.totalorder %s22, 0
      %p85 = por %p83, %p84
      %p86 = scmp.ne.s32.totalorder %s72, %s73
      %p87 = scmp.eq.s32.totalorder %s23, 1
      %p88 = por %p86, %p87
      %p90 = scmp.ne.s32.totalorder %s73, %s89
      %p91 = scmp.eq.s32.totalorder %s23, 0
      %p92 = por %p90, %p91
      %s93 = ssub.s32 %s24, %s36
      %s94 = ssub.s32 %s25, %s32
      %s95 = sor.u32 %s93, %s94
      %p96 = scmp.eq.s32.totalorder %s95, 0
      %s98 = sadd.s32 %s97, 1
      %s99 = scalar_select %p96, %s97, %s98
      %p102 = pneg %p96
      %p103 = scmp.eq.s32.totalorder %s17, 1
      %p104 = por %p102, %p103
      %p105 = scmp.ne.s32.totalorder %s97, %s100
      %p106 = scmp.eq.s32.totalorder %s17, 0
      %p107 = por %p105, %p106
      %p108 = scmp.ne.s32.totalorder %s97, %s100
      %p109 = scmp.eq.s32.totalorder %s22, 1
      %p110 = por %p108, %p109
      %p111 = scmp.ne.s32.totalorder %s100, %s101
      %p112 = scmp.eq.s32.totalorder %s22, 0
      %p113 = por %p111, %p112
      %p114 = scmp.ne.s32.totalorder %s100, %s101
      %p115 = scmp.eq.s32.totalorder %s23, 1
      %p116 = por %p114, %p115
      %p118 = scmp.ne.s32.totalorder %s101, %s117
      %p119 = scmp.eq.s32.totalorder %s23, 0
      %p120 = por %p118, %p119
      %p121 = scmp.le.s32.totalorder 1, %s17
      %p122 = scmp.lt.s32.totalorder %s17, 3
      %p123 = pnand %p121, %p122
      %p124 = pneg %p123
      // Predicated region
      $region9: #{tpu_custom_call.1} parent=5 // pred_check
        _
      $region10: #{tpu_custom_call.1} parent=5 // pred_check_branch
        %126 = sbr.rel (%p123) target = $region12
      $region11: #{tpu_custom_call.1} parent=5 // pred_region
        %s127 = ssub.s32 %s17, 1
      $region12: #{tpu_custom_call.1} parent=5 // pred_fallthru
        _
      %p128 = scmp.lt.s32.totalorder %s17, 2
      // Predicated region
      $region13: #{tpu_custom_call.1} parent=5 // pred_check
        %p129 = pneg %p128
      $region14: #{tpu_custom_call.1} parent=5 // pred_check_branch
        %131 = sbr.rel (%p129) target = $region16
      $region15: #{tpu_custom_call.1} parent=5 // pred_region
        // Predicated region
        $region17: #{tpu_custom_call.1} parent=15 // pred_check
          %p132 = pneg %p51
        $region18: #{tpu_custom_call.1} parent=15 // pred_check_branch
          %134 = sbr.rel (%p132) target = $region20
        $region19: #{tpu_custom_call.1} parent=15 // pred_region
          %s135 = sand.u32 %s41, 1
          %s136 = scalar_lea.sflag [#allocation3], %s135
          %s137 = sand.u32 %s41, 1
          %s138 = smul.addr %s137, 32
          %s139 = scalar_lea.vmem [#allocation2], %s138
          %s141 = ssub.s32 512, 512
          %142 = vsyncadd %s136, %s141
          %s143 = smul.addr %s24, 4
          %s144 = sadd.s32 %s25, %s143
          %s145 = smul.addr %s144, 128
          %s146 = scalar_lea.hbm %s0, %s145
          %s147 = sshll.u32 %s139, 4
          %s148 = int_to_ptr.vmem [resolvable:$true] %s147
          %153 = dma.hbm_to_vmem [thread:$0]  %s146, 512, %s148, %s136, 128, 128, 8
        $region20: #{tpu_custom_call.1} parent=15 // pred_fallthru
          _
        // Predicated region
        $region21: #{tpu_custom_call.1} parent=15 // pred_check
          %p154 = pneg %p79
        $region22: #{tpu_custom_call.1} parent=15 // pred_check_branch
          %156 = sbr.rel (%p154) target = $region24
        $region23: #{tpu_custom_call.1} parent=15 // pred_region
          %s157 = sand.u32 %s69, 1
          %s158 = scalar_lea.sflag [#allocation6], %s157
          %s159 = sand.u32 %s69, 1
          %s160 = smul.addr %s159, 8
          %s161 = scalar_lea.vmem [#allocation5], %s160
          %s163 = ssub.s32 128, 128
          %164 = vsyncadd %s158, %s163
          %s165 = sadd.s32 %s25, %s24
          %s166 = smul.addr %s165, 128
          %s167 = scalar_lea.hbm %s1, %s166
          %s169 = sshll.u32 %s161, 4
          %s170 = int_to_ptr.vmem [resolvable:$true] %s169
          %172 = dma.hbm_to_vmem [thread:$0]  %s167, 128, %s170, %s158
        $region24: #{tpu_custom_call.1} parent=15 // pred_fallthru
          _
      $region16: #{tpu_custom_call.1} parent=5 // pred_fallthru
        _
      %p173 = scmp.le.s32.totalorder 1, %s17
      %p174 = scmp.lt.s32.totalorder %s17, 3
      %p175 = pnand %p173, %p174
      %p176 = pneg %p175
      // Predicated region
      $region25: #{tpu_custom_call.1} parent=5 // pred_check
        _
      $region26: #{tpu_custom_call.1} parent=5 // pred_check_branch
        %178 = sbr.rel (%p175) target = $region28
      $region27: #{tpu_custom_call.1} parent=5 // pred_region
        %s179 = ssub.s32 %s17, 1
        %s180 = sand.u32 %s44, 1
        %s181 = scalar_lea.sflag [#allocation3], %s180
        %s182 = sand.u32 %s44, 1
        %s183 = smul.addr %s182, 32
        %s184 = scalar_lea.vmem [#allocation2], %s183
        // Predicated region
        $region29: #{tpu_custom_call.1} parent=27 // pred_check
          %p185 = pneg %p57
        $region30: #{tpu_custom_call.1} parent=27 // pred_check_branch
          %187 = sbr.rel (%p185) target = $region32
        $region31: #{tpu_custom_call.1} parent=27 // pred_region
          %188 = dma.done %s181, 512
        $region32: #{tpu_custom_call.1} parent=27 // pred_fallthru
          _
        %s189 = sand.u32 %s72, 1
        %s190 = scalar_lea.sflag [#allocation6], %s189
        %s191 = sand.u32 %s72, 1
        %s192 = smul.addr %s191, 8
        %s193 = scalar_lea.vmem [#allocation5], %s192
        // Predicated region
        $region33: #{tpu_custom_call.1} parent=27 // pred_check
          %p194 = pneg %p85
        $region34: #{tpu_custom_call.1} parent=27 // pred_check_branch
          %196 = sbr.rel (%p194) target = $region36
        $region35: #{tpu_custom_call.1} parent=27 // pred_region
          %197 = dma.done %s190, 128
        $region36: #{tpu_custom_call.1} parent=27 // pred_fallthru
          _
        %s198 = sand.u32 %s44, 1
        %s199 = scalar_lea.sflag [#allocation3], %s198
        %s200 = sand.u32 %s44, 1
        %s201 = smul.addr %s200, 32
        %s202 = scalar_lea.vmem [#allocation2], %s201
        %p203 = pneg %p57
        %p204 = pneg %p54
        %s205 = sand.u32 %s72, 1
        %s206 = scalar_lea.sflag [#allocation6], %s205
        %s207 = sand.u32 %s72, 1
        %s208 = smul.addr %s207, 8
        %s209 = scalar_lea.vmem [#allocation5], %s208
        %p210 = pneg %p85
        %p211 = pneg %p82
        %p212 = pneg %p113
        %p213 = pneg %p110
        %s214 = sand.u32 %s100, 1
        %s215 = scalar_lea.sflag [#allocation4], %s214
        %s216 = sand.u32 %s100, 1
        %s217 = smul.addr %s216, 8
        %s218 = scalar_lea.vmem [#allocation7], %s217
        %v219 = vld [vmem:[%s184] sm:$0xff]
        %v220 = vld [vmem:[%s184 + $0x8] sm:$0xff]
        %v221 = vld [vmem:[%s184 + $0x10] sm:$0xff]
        %v222 = vld [vmem:[%s184 + $0x18] sm:$0xff]
        %v223 = vld [vmem:[%s193] sm:$0xff]
        %v224 = vmax.f32 %v219, %v220
        %v225 = vmax.f32 %v221, %v222
        %v226 = vmax.f32 %v224, %v225
        %v227 = vsub.f32 %v219, %v226
        %v228 = vsub.f32 %v220, %v226
        %v229 = vsub.f32 %v221, %v226
        %v230 = vsub.f32 %v222, %v226
        %v231 = vmul.f32 %v227, 1.442695
        %v232 = vpow.pop %v231
        %v233 = vmul.f32 %v228, 1.442695
        %v234 = vpow.pop %v233
        %v235 = vmul.f32 %v229, 1.442695
        %v236 = vpow.pop %v235
        %v237 = vmul.f32 %v230, 1.442695
        %v238 = vpow.pop %v237
        %v239 = vadd.f32 %v232, %v234
        %v240 = vadd.f32 %v239, %v236
        %v241 = vadd.f32 %v240, %v238
        %vm242 = vcmp.eq.s32.totalorder %v223, 0
        %vm243 = vcmp.eq.s32.totalorder %v223, 1
        %vm244 = vcmp.eq.s32.totalorder %v223, 2
        %vm245 = vcmp.eq.s32.totalorder %v223, 3
        %v246 = vsel %vm242, %v219, 0.0
        %v247 = vsel %vm243, %v220, 0.0
        %v248 = vsel %vm244, %v221, 0.0
        %v249 = vsel %vm245, %v222, 0.0
        %v250 = vadd.f32 %v246, %v247
        %v251 = vadd.f32 %v250, %v248
        %v252 = vadd.f32 %v251, %v249
        %v253 = vlog2.pop %v241
        %v254 = vmul.f32 %v253, 0.6931472
        %v255 = vsub.f32 %v252, %v226
        %v256 = vsub.f32 %v254, %v255
        %v257 = vsub.f32 0.0, %v256
        %v258 = vmul.f32 %v257, 1.442695
        %v259 = vpow.pop %v258
        %v260 = vsub.f32 1.0, %v259
        %v261 = vadd.f32 %v256, %v260
        %262 = vst [vmem:[%s218] sm:$0xff] %v261
        %s263 = sand.u32 %s100, 1
        %s264 = scalar_lea.sflag [#allocation4], %s263
        %s265 = sand.u32 %s100, 1
        %s266 = smul.addr %s265, 8
        %s267 = scalar_lea.vmem [#allocation7], %s266
        // Predicated region
        $region37: #{tpu_custom_call.1} parent=27 // pred_check
          %p268 = pneg %p110
        $region38: #{tpu_custom_call.1} parent=27 // pred_check_branch
          %270 = sbr.rel (%p268) target = $region40
        $region39: #{tpu_custom_call.1} parent=27 // pred_region
          %s272 = ssub.s32 128, 128
          %273 = vsyncadd %s264, %s272
          %s274 = sadd.s32 %s27, %s26
          %s275 = smul.addr %s274, 128
          %s276 = scalar_lea.hbm %s2, %s275
          %s278 = sshll.u32 %s267, 4
          %s279 = int_to_ptr.vmem [resolvable:$true] %s278
          %281 = dma.vmem_to_hbm [thread:$0]  %s279, 128, %s276, %s264
        $region40: #{tpu_custom_call.1} parent=27 // pred_fallthru
          _
      $region28: #{tpu_custom_call.1} parent=5 // pred_fallthru
        _
      %p282 = scmp.le.s32.totalorder 2, %s17
      // Predicated region
      $region41: #{tpu_custom_call.1} parent=5 // pred_check
        %p283 = pneg %p282
      $region42: #{tpu_custom_call.1} parent=5 // pred_check_branch
        %285 = sbr.rel (%p283) target = $region44
      $region43: #{tpu_custom_call.1} parent=5 // pred_region
        %s286 = ssub.s32 %s17, 2
        // Predicated region
        $region45: #{tpu_custom_call.1} parent=43 // pred_check
          %p287 = pneg %p116
        $region46: #{tpu_custom_call.1} parent=43 // pred_check_branch
          %289 = sbr.rel (%p287) target = $region48
        $region47: #{tpu_custom_call.1} parent=43 // pred_region
          %s290 = sand.u32 %s101, 1
          %s291 = scalar_lea.sflag [#allocation4], %s290
          %s292 = sand.u32 %s101, 1
          %s293 = smul.addr %s292, 8
          %s294 = scalar_lea.vmem [#allocation7], %s293
          %295 = dma.done %s291, 128
        $region48: #{tpu_custom_call.1} parent=43 // pred_fallthru
          _
      $region44: #{tpu_custom_call.1} parent=5 // pred_fallthru
        _
    $region6: #{tpu_custom_call.1} parent=1 // loop_footer
      %s21 = sadd.s32 1, %s17
    $region7: #{tpu_custom_call.1} parent=1 // loop_footer_branch
      %16 = sbr.rel target = $region3
    $region8: #{tpu_custom_call.1} parent=1 // loop_exit
      _
    %296 = vsyncpa [#allocation3], 1
    %s297 = scalar_lea.sflag [#allocation3], 1
    %298 = vsyncpa %s297, 1
    %299 = vsyncpa [#allocation6], 1
    %s300 = scalar_lea.sflag [#allocation6], 1
    %301 = vsyncpa %s300, 1
    %302 = vsyncpa [#allocation4], 1
    %s303 = scalar_lea.sflag [#allocation4], 1
    %304 = vsyncpa %s303, 1

</llo_original>
